<compile_context>
chip_gen: v6e
topology: v6e:2x2x1
jax: 0.10.0
libtpu: 0.0.40
codegen_flags: <defaults>
</compile_context>

<pallas_src>
import functools
import math

import jax
import jax.numpy as jnp
from jax.experimental import pallas as pl
from jax.experimental.pallas import tpu as pltpu

PAD = 128  # per-head lane padding (vreg lane width)


def decoder_kernel(r_ref, w1_ref, b1_ref, wh_ref, bh_ref, out_ref):
    # --- phi_h: Linear (BN pre-folded) -> ReLU (Dropout = identity in eval) ---
    h = jnp.dot(r_ref[...], w1_ref[...], preferred_element_type=jnp.float32)
    h = jnp.maximum(h + b1_ref[...], 0.0)                      # [TB, H]

    # --- fused, lane-padded heads: one MXU pass -> [TB, 3*128] ---
    # columns [0:128)   = pi logits (pads biased to -1e30)
    # columns [128:256) = mu
    # columns [256:384) = log sigma
    z = jnp.dot(h, wh_ref[...], preferred_element_type=jnp.float32) + bh_ref[...]

    logits = z[:, :PAD]
    mu = z[:, PAD:2 * PAD]
    log_sigma = z[:, 2 * PAD:3 * PAD]

    # Numerically stable softmax with EXACT normalization (padded cols -> exp(-1e30)=0).
    logits = logits - jnp.max(logits, axis=-1, keepdims=True)
    e = jnp.exp(logits)
    pi = e / jnp.sum(e, axis=-1, keepdims=True)

    # Three 128-aligned, unmasked stores into the lane-dense fused output block.
    out_ref[:, :PAD] = pi
    out_ref[:, PAD:2 * PAD] = mu
    out_ref[:, 2 * PAD:3 * PAD] = jnp.exp(log_sigma)


def decoder_forward(r, kparams, n_gaussians, *, tb=None):
    """r: [B, input_dim] float32.  kparams: dict from prepare_kernel_params."""
    B, d_in = r.shape
    H = kparams["w1"].shape[1]
    out_w = 3 * PAD

    # Batch tile selection: single block for small/moderate B (avoids per-grid-step
    # overhead); for very large B use the largest multiple-of-256 tile that divides B.
    if tb is None or tb <= 0 or B % tb != 0 or (tb % 8 != 0 and tb != B):
        if B <= 1024:
            tb = B
        else:
            tb = B
            for cand in (2048, 1024, 512, 256):
                if B % cand == 0:
                    tb = cand
                    break
    grid = (B // tb,)

    flops = 2 * B * (d_in * H + H * out_w)
    transcendentals = B * (PAD + PAD)  # softmax exp + sigma exp (per padded lane)
    bytes_accessed = 4 * (r.size
                          + kparams["w1"].size + kparams["b1"].size
                          + kparams["wh"].size + kparams["bh"].size
                          + B * out_w)

    fused = pl.pallas_call(
        decoder_kernel,
        out_shape=jax.ShapeDtypeStruct((B, out_w), jnp.float32),
        grid=grid,
        in_specs=[
            pl.BlockSpec((tb, d_in), lambda i: (i, 0)),    # r tile (pipelined over batch)
            pl.BlockSpec((d_in, H), lambda i: (0, 0)),     # w1 (VMEM-resident)
            pl.BlockSpec((1, H), lambda i: (0, 0)),        # b1
            pl.BlockSpec((H, out_w), lambda i: (0, 0)),    # fused, lane-padded head weight
            pl.BlockSpec((1, out_w), lambda i: (0, 0)),    # fused, lane-padded head bias
        ],
        out_specs=pl.BlockSpec((tb, out_w), lambda i: (i, 0)),
        compiler_params=pltpu.CompilerParams(
            dimension_semantics=("parallel",)),            # splits batch across TCs on v7x
        cost_estimate=pl.CostEstimate(
            flops=flops,
            transcendentals=transcendentals,
            bytes_accessed=bytes_accessed),
    )(r, kparams["w1"], kparams["b1"], kparams["wh"], kparams["bh"])

    pi = fused[:, :n_gaussians]
    mu = fused[:, PAD:PAD + n_gaussians]
    sigma = fused[:, 2 * PAD:2 * PAD + n_gaussians]
    return pi, mu, sigma


def init_params(key, input_dim, hidden_dim, n_gaussians):
    """Deterministic synthetic params in PyTorch layout (weights stored as [in, out])."""
    ks = jax.random.split(key, 8)

    def lin(kw, kb, d_in, d_out):
        bound = 1.0 / math.sqrt(d_in)
        w = jax.random.uniform(kw, (d_in, d_out), jnp.float32, -bound, bound)
        b = jax.random.uniform(kb, (1, d_out), jnp.float32, -bound, bound)
        return w, b

    w1, b1 = lin(ks[0], ks[1], input_dim, hidden_dim)
    wpi, bpi = lin(ks[2], ks[3], hidden_dim, n_gaussians)
    wmu, bmu = lin(ks[4], ks[5], hidden_dim, n_gaussians)
    wsig, bsig = lin(ks[6], ks[7], hidden_dim, n_gaussians)

    # BatchNorm1d parameters / running stats (eval mode).
    return dict(
        w1=w1, b1=b1,
        gamma=jnp.ones((hidden_dim,), jnp.float32),
        beta=jnp.zeros((hidden_dim,), jnp.float32),
        running_mean=jnp.zeros((hidden_dim,), jnp.float32),
        running_var=jnp.ones((hidden_dim,), jnp.float32),
        bn_eps=1e-5,
        wpi=wpi, bpi=bpi, wmu=wmu, bmu=bmu, wsig=wsig, bsig=bsig,
    )


def prepare_kernel_params(p):
    """Host-side prep: fold BN into Linear #1 and build the fused, lane-padded heads."""
    H = p["w1"].shape[1]
    n_g = p["wpi"].shape[1]

    scale = p["gamma"] / jnp.sqrt(p["running_var"] + p["bn_eps"])
    shift = p["beta"] - p["running_mean"] * scale
    w1 = p["w1"] * scale[None, :]
    b1 = p["b1"] * scale[None, :] + shift[None, :]

    # Fused head weight [H, 3*128]: real columns at 0 / 128 / 256, zero elsewhere.
    wh = jnp.zeros((H, 3 * PAD), jnp.float32)
    wh = wh.at[:, 0:n_g].set(p["wpi"])
    wh = wh.at[:, PAD:PAD + n_g].set(p["wmu"])
    wh = wh.at[:, 2 * PAD:2 * PAD + n_g].set(p["wsig"])

    # Fused head bias [1, 3*128]: padded pi-logit columns get -1e30 so softmax ignores them.
    bh = jnp.zeros((1, 3 * PAD), jnp.float32)
    bh = bh.at[:, 0:PAD].set(-1e30)
    bh = bh.at[:, 0:n_g].set(p["bpi"])
    bh = bh.at[:, PAD:PAD + n_g].set(p["bmu"])
    bh = bh.at[:, 2 * PAD:2 * PAD + n_g].set(p["bsig"])

    return dict(w1=w1, b1=b1, wh=wh, bh=bh)


def decoder_reference(r, p):
    """Pure-JAX reference of the eval-mode PyTorch forward."""
    scale = p["gamma"] / jnp.sqrt(p["running_var"] + p["bn_eps"])
    shift = p["beta"] - p["running_mean"] * scale
    h = jnp.maximum((r @ p["w1"] + p["b1"]) * scale[None, :] + shift[None, :], 0.0)
    pi = jax.nn.softmax(h @ p["wpi"] + p["bpi"], axis=-1)
    mu = h @ p["wmu"] + p["bmu"]
    sigma = jnp.exp(h @ p["wsig"] + p["bsig"])
    return pi, mu, sigma


if __name__ == "__main__":
    B, input_dim, hidden_dim, n_gaussians = 32, 32, 32, 8

    key = jax.random.PRNGKey(0)
    k_r, k_p = jax.random.split(key)
    r = jax.random.normal(k_r, (B, input_dim), jnp.float32)
    params = init_params(k_p, input_dim, hidden_dim, n_gaussians)
    kparams = prepare_kernel_params(params)

    # Default tile selection -> single block, grid=(1,) at these sizes.
    pi, mu, sigma = decoder_forward(r, kparams, n_gaussians)
    jax.block_until_ready((pi, mu, sigma))

    # correctness vs pure-JAX reference
    pi_r, mu_r, sigma_r = decoder_reference(r, params)
    assert pi.shape == (B, n_gaussians)
    assert mu.shape == (B, n_gaussians)
    assert sigma.shape == (B, n_gaussians)
    assert jnp.allclose(pi, pi_r, atol=1e-4, rtol=1e-4)
    assert jnp.allclose(mu, mu_r, atol=1e-4, rtol=1e-4)
    assert jnp.allclose(sigma, sigma_r, atol=1e-4, rtol=1e-4)
    assert jnp.allclose(jnp.sum(pi, axis=-1), 1.0, atol=1e-5)
    assert bool(jnp.all(sigma > 0.0))

    print("KERNEL_OK")
</pallas_src>

<mosaic_0001>
module attributes {stable_mosaic.version = 11 : i64} {
  func.func @decoder_kernel(%arg0: i32, %arg1: memref<32x32xf32, #tpu.memory_space<vmem>>, %arg2: memref<32x32xf32, #tpu.memory_space<vmem>>, %arg3: memref<1x32xf32, #tpu.memory_space<vmem>>, %arg4: memref<32x384xf32, #tpu.memory_space<vmem>>, %arg5: memref<1x384xf32, #tpu.memory_space<vmem>>, %arg6: memref<32x384xf32, #tpu.memory_space<vmem>>) attributes {dimension_semantics = [#tpu.dimension_semantics<parallel>], iteration_bounds = array<i64: 1>, scalar_prefetch = 0 : i64, scratch_operands = 0 : i64, tpu.core_type = #tpu.core_type<tc>, window_params = [{transform_indices = @transform_0, window_bounds = array<i64: 32, 32>}, {pipeline_mode = #tpu.pipeline_mode<synchronous>, transform_indices = @transform_1, window_bounds = array<i64: 32, 32>}, {pipeline_mode = #tpu.pipeline_mode<synchronous>, transform_indices = @transform_2, window_bounds = array<i64: 1, 32>}, {pipeline_mode = #tpu.pipeline_mode<synchronous>, transform_indices = @transform_3, window_bounds = array<i64: 32, 384>}, {pipeline_mode = #tpu.pipeline_mode<synchronous>, transform_indices = @transform_4, window_bounds = array<i64: 1, 384>}, {transform_indices = @transform_5, window_bounds = array<i64: 32, 384>}]} {
    %c0 = arith.constant 0 : index
    %c0_0 = arith.constant 0 : index
    %0 = vector.load %arg1[%c0, %c0_0] : memref<32x32xf32, #tpu.memory_space<vmem>>, vector<32x32xf32>
    %c0_1 = arith.constant 0 : index
    %c0_2 = arith.constant 0 : index
    %1 = vector.load %arg2[%c0_1, %c0_2] : memref<32x32xf32, #tpu.memory_space<vmem>>, vector<32x32xf32>
    %cst = arith.constant dense<0.000000e+00> : vector<32x32xf32>
    %2 = tpu.matmul %0, %1, %cst {dimension_numbers = #tpu.dot_dimension_numbers<[1], [0], [0], [1], [0, 0, 1, 1], [], []>} : vector<32x32xf32>, vector<32x32xf32>, vector<32x32xf32> -> vector<32x32xf32>
    %c0_3 = arith.constant 0 : index
    %c0_4 = arith.constant 0 : index
    %3 = vector.load %arg3[%c0_3, %c0_4] : memref<1x32xf32, #tpu.memory_space<vmem>>, vector<1x32xf32>
    %4 = vector.broadcast %3 : vector<1x32xf32> to vector<32x32xf32>
    %5 = arith.addf %2, %4 : vector<32x32xf32>
    %cst_5 = arith.constant 0.000000e+00 : f32
    %6 = vector.broadcast %cst_5 : f32 to vector<32x32xf32>
    %7 = arith.maximumf %5, %6 : vector<32x32xf32>
    %c0_6 = arith.constant 0 : index
    %c0_7 = arith.constant 0 : index
    %8 = vector.load %arg4[%c0_6, %c0_7] : memref<32x384xf32, #tpu.memory_space<vmem>>, vector<32x384xf32>
    %cst_8 = arith.constant dense<0.000000e+00> : vector<32x384xf32>
    %9 = tpu.matmul %7, %8, %cst_8 {dimension_numbers = #tpu.dot_dimension_numbers<[1], [0], [0], [1], [0, 0, 1, 1], [], []>} : vector<32x32xf32>, vector<32x384xf32>, vector<32x384xf32> -> vector<32x384xf32>
    %c0_9 = arith.constant 0 : index
    %c0_10 = arith.constant 0 : index
    %10 = vector.load %arg5[%c0_9, %c0_10] : memref<1x384xf32, #tpu.memory_space<vmem>>, vector<1x384xf32>
    %11 = vector.broadcast %10 : vector<1x384xf32> to vector<32x384xf32>
    %12 = arith.addf %9, %11 : vector<32x384xf32>
    %13 = vector.extract_strided_slice %12 {offsets = [0, 0], sizes = [32, 128], strides = [1, 1]} : vector<32x384xf32> to vector<32x128xf32>
    %14 = vector.extract_strided_slice %12 {offsets = [0, 128], sizes = [32, 128], strides = [1, 1]} : vector<32x384xf32> to vector<32x128xf32>
    %15 = vector.extract_strided_slice %12 {offsets = [0, 256], sizes = [32, 128], strides = [1, 1]} : vector<32x384xf32> to vector<32x128xf32>
    %cst_11 = arith.constant dense<0xFF800000> : vector<32xf32>
    %16 = vector.multi_reduction <maximumf>, %13, %cst_11 [1] : vector<32x128xf32> to vector<32xf32>
    %17 = vector.shape_cast %16 : vector<32xf32> to vector<32x1xf32>
    %18 = vector.broadcast %17 : vector<32x1xf32> to vector<32x128xf32>
    %19 = arith.subf %13, %18 : vector<32x128xf32>
    %20 = math.exp %19 : vector<32x128xf32>
    %cst_12 = arith.constant dense<0.000000e+00> : vector<32xf32>
    %21 = vector.multi_reduction <add>, %20, %cst_12 [1] : vector<32x128xf32> to vector<32xf32>
    %22 = vector.shape_cast %21 : vector<32xf32> to vector<32x1xf32>
    %23 = vector.broadcast %22 : vector<32x1xf32> to vector<32x128xf32>
    %24 = arith.divf %20, %23 : vector<32x128xf32>
    %c0_13 = arith.constant 0 : index
    %c0_14 = arith.constant 0 : index
    %25 = vector.load %arg6[%c0_13, %c0_14] : memref<32x384xf32, #tpu.memory_space<vmem>>, vector<32x128xf32>
    tpu.vector_store %arg6[%c0_13, %c0_14], %24 {strides = array<i32>} : memref<32x384xf32, #tpu.memory_space<vmem>>, vector<32x128xf32>,
    %c0_15 = arith.constant 0 : index
    %c128 = arith.constant 128 : index
    %26 = vector.load %arg6[%c0_15, %c128] : memref<32x384xf32, #tpu.memory_space<vmem>>, vector<32x128xf32>
    tpu.vector_store %arg6[%c0_15, %c128], %14 {strides = array<i32>} : memref<32x384xf32, #tpu.memory_space<vmem>>, vector<32x128xf32>,
    %27 = math.exp %15 : vector<32x128xf32>
    %c0_16 = arith.constant 0 : index
    %c256 = arith.constant 256 : index
    %28 = vector.load %arg6[%c0_16, %c256] : memref<32x384xf32, #tpu.memory_space<vmem>>, vector<32x128xf32>
    tpu.vector_store %arg6[%c0_16, %c256], %27 {strides = array<i32>} : memref<32x384xf32, #tpu.memory_space<vmem>>, vector<32x128xf32>,
    return
  }
  func.func @transform_0(%arg0: i32) -> (i32, i32) {
    %c0_i32 = arith.constant 0 : i32
    %c0_i32_0 = arith.constant 0 : i32
    return %arg0, %c0_i32 : i32, i32
  }
  func.func @transform_1(%arg0: i32) -> (i32, i32) {
    %c0_i32 = arith.constant 0 : i32
    %c0_i32_0 = arith.constant 0 : i32
    %c0_i32_1 = arith.constant 0 : i32
    return %c0_i32, %c0_i32_0 : i32, i32
  }
  func.func @transform_2(%arg0: i32) -> (i32, i32) {
    %c0_i32 = arith.constant 0 : i32
    %c0_i32_0 = arith.constant 0 : i32
    %c0_i32_1 = arith.constant 0 : i32
    return %c0_i32, %c0_i32_0 : i32, i32
  }
  func.func @transform_3(%arg0: i32) -> (i32, i32) {
    %c0_i32 = arith.constant 0 : i32
    %c0_i32_0 = arith.constant 0 : i32
    %c0_i32_1 = arith.constant 0 : i32
    return %c0_i32, %c0_i32_0 : i32, i32
  }
  func.func @transform_4(%arg0: i32) -> (i32, i32) {
    %c0_i32 = arith.constant 0 : i32
    %c0_i32_0 = arith.constant 0 : i32
    %c0_i32_1 = arith.constant 0 : i32
    return %c0_i32, %c0_i32_0 : i32, i32
  }
  func.func @transform_5(%arg0: i32) -> (i32, i32) {
    %c0_i32 = arith.constant 0 : i32
    %c0_i32_0 = arith.constant 0 : i32
    return %arg0, %c0_i32 : i32, i32
  }
}

</mosaic_0001>

<llo_original>
// kernel: tpu_custom_call.1
$region0: #{tpu_custom_call.1}
  #allocation0 [shape = 'u32[]', space=smem, size = 0x4, offset = 0x4, fixed_abs, tag = 'smem constant byte address 0x4 - core index']
  #allocation1 [shape = 'u32[144,128]{1,0:T(1,128)}', space=vmem, size = 0x12000, scoped, tag = 'internal scratch']
  %s0 = inlined_call_operand.hbm [shape: f32[32,32], index: 0, kind: input, shape index: {}]
  %s1 = inlined_call_operand.hbm [shape: f32[32,32], index: 1, kind: input, shape index: {}]
  %s2 = inlined_call_operand.vmem [shape: f32[1,32], index: 2, kind: input, shape index: {}]
  %s3 = inlined_call_operand.hbm [shape: f32[32,384], index: 3, kind: input, shape index: {}]
  %s4 = inlined_call_operand.vmem [shape: f32[1,384], index: 4, kind: input, shape index: {}]
  %s5 = inlined_call_operand.hbm [shape: f32[32,384], index: 5, kind: output, shape index: {}]
  %s6 = sld [smem:[#allocation0]]
  $region42: #{tpu_custom_call.1} parent=0
    _
  %s8 = ssub.s32 1, %s6
  %s9 = scalar_select 0, %s8, %s6
  $region1: #{tpu_custom_call.1} parent=0
    #allocation2 [shape = 'u8[16384]{0}', space=vmem, size = 0x4000, scoped, tag = 'input window, operand 0, single buffered']
    #allocation3 [shape = 's32[1]{0}', space=sflag, size = 0x4, scoped, tag = 'scoped memory for tpu_custom_call.1']
    #allocation4 [shape = 's32[1]{0}', space=sflag, size = 0x4, scoped, tag = 'scoped memory for tpu_custom_call.1']
    #allocation5 [shape = 'u8[16384]{0}', space=vmem, size = 0x4000, scoped, tag = 'input window, operand 1, single buffered']
    #allocation6 [shape = 's32[1]{0}', space=sflag, size = 0x4, scoped, tag = 'scoped memory for tpu_custom_call.1']
    #allocation7 [shape = 'u8[49152]{0}', space=vmem, size = 0xc000, scoped, tag = 'input window, operand 3, single buffered']
    #allocation8 [shape = 'u8[49152]{0}', space=vmem, size = 0xc000, scoped, tag = 'output window, operand 0, single buffered']
    %10 = vsyncpa [#allocation3], 0
    %11 = vsyncpa [#allocation6], 0
    %12 = vsyncpa [#allocation4], 0
    // Predicated region
    $region2: #{tpu_custom_call.1} parent=1 // pred_check
      _
    $region3: #{tpu_custom_call.1} parent=1 // pred_check_branch
      %14 = sbr.rel (0) target = $region5
    $region4: #{tpu_custom_call.1} parent=1 // pred_region
      %s16 = ssub.s32 512, 512
      %17 = vsyncadd [#allocation3], %s16
      %s18 = sshll.u32 [#allocation2], 4
      %s19 = int_to_ptr.vmem [resolvable:$true] %s18
      %24 = dma.hbm_to_vmem [thread:$0]  %s0, 512, %s19, [#allocation3], 128, 128, 8
    $region5: #{tpu_custom_call.1} parent=1 // pred_fallthru
      _
    // Predicated region
    $region6: #{tpu_custom_call.1} parent=1 // pred_check
      _
    $region7: #{tpu_custom_call.1} parent=1 // pred_check_branch
      %26 = sbr.rel (0) target = $region9
    $region8: #{tpu_custom_call.1} parent=1 // pred_region
      %s28 = ssub.s32 512, 512
      %29 = vsyncadd [#allocation6], %s28
      %s30 = sshll.u32 [#allocation5], 4
      %s31 = int_to_ptr.vmem [resolvable:$true] %s30
      %36 = dma.hbm_to_vmem [thread:$0]  %s1, 512, %s31, [#allocation6], 128, 128, 8
    $region9: #{tpu_custom_call.1} parent=1 // pred_fallthru
      _
    // Predicated region
    $region10: #{tpu_custom_call.1} parent=1 // pred_check
      _
    $region11: #{tpu_custom_call.1} parent=1 // pred_check_branch
      %38 = sbr.rel (0) target = $region13
    $region12: #{tpu_custom_call.1} parent=1 // pred_region
      _
    $region13: #{tpu_custom_call.1} parent=1 // pred_fallthru
      _
    // Predicated region
    $region14: #{tpu_custom_call.1} parent=1 // pred_check
      _
    $region15: #{tpu_custom_call.1} parent=1 // pred_check_branch
      %40 = sbr.rel (0) target = $region17
    $region16: #{tpu_custom_call.1} parent=1 // pred_region
      %s42 = ssub.s32 1536, 1536
      %43 = vsyncadd [#allocation6], %s42
      %s44 = sshll.u32 [#allocation7], 4
      %s45 = int_to_ptr.vmem [resolvable:$true] %s44
      %50 = dma.hbm_to_vmem [thread:$0]  %s3, 1536, %s45, [#allocation6], 384, 384, 24
    $region17: #{tpu_custom_call.1} parent=1 // pred_fallthru
      _
    // Predicated region
    $region18: #{tpu_custom_call.1} parent=1 // pred_check
      _
    $region19: #{tpu_custom_call.1} parent=1 // pred_check_branch
      %52 = sbr.rel (0) target = $region21
    $region20: #{tpu_custom_call.1} parent=1 // pred_region
      _
    $region21: #{tpu_custom_call.1} parent=1 // pred_fallthru
      _
    // Predicated region
    $region22: #{tpu_custom_call.1} parent=1 // pred_check
      _
    $region23: #{tpu_custom_call.1} parent=1 // pred_check_branch
      %54 = sbr.rel (0) target = $region25
    $region24: #{tpu_custom_call.1} parent=1 // pred_region
      %55 = dma.done [#allocation3], 512
    $region25: #{tpu_custom_call.1} parent=1 // pred_fallthru
      _
    // Predicated region
    $region26: #{tpu_custom_call.1} parent=1 // pred_check
      _
    $region27: #{tpu_custom_call.1} parent=1 // pred_check_branch
      %57 = sbr.rel (0) target = $region29
    $region28: #{tpu_custom_call.1} parent=1 // pred_region
      %58 = dma.done [#allocation6], 512
    $region29: #{tpu_custom_call.1} parent=1 // pred_fallthru
      _
    // Predicated region
    $region30: #{tpu_custom_call.1} parent=1 // pred_check
      _
    $region31: #{tpu_custom_call.1} parent=1 // pred_check_branch
      %60 = sbr.rel (0) target = $region33
    $region32: #{tpu_custom_call.1} parent=1 // pred_region
      %61 = dma.done [#allocation6], 1536
    $region33: #{tpu_custom_call.1} parent=1 // pred_fallthru
      _
    %v62 = vld [vmem:[#allocation2] sm:$0xff]
    %v63 = vld [vmem:[#allocation2 + $0x8] sm:$0xff]
    %v64 = vld [vmem:[#allocation2 + $0x10] sm:$0xff]
    %v65 = vld [vmem:[#allocation2 + $0x18] sm:$0xff]
    %v66 = vld [vmem:[#allocation5] sm:$0xff]
    %v67 = vld [vmem:[#allocation5 + $0x8] sm:$0xff]
    %v68 = vld [vmem:[#allocation5 + $0x10] sm:$0xff]
    %v69 = vld [vmem:[#allocation5 + $0x18] sm:$0xff]
    %v70 = vld [vmem:[%s2] sm:$0x1]
    %v72 = vlaneseq
    %v73 = vshrl.u32 %v72, 7
    %v74 = vsub.s32 0, %v73
    %v75 = vrot.slane %v70, %v74
    %vm77 = vcmask 261120
    %v79 = vsel %vm77, %v62, 0
    %v82 = vsel %vm77, %v63, 0
    %v85 = vsel %vm77, %v64, 0
    %v88 = vsel %vm77, %v65, 0
    %90 = vmatprep.subr.mxu0 0.0
    %91 = vmatpush1.msra.mxu0 0.0
    %92 = vmatprep.subr.mxu0 0.0
    %93 = vmatpush1.msra.mxu0 0.0
    %94 = vmatprep.subr.mxu0 0.0
    %95 = vmatpush1.msra.mxu0 0.0
    %96 = vmatprep.subr.mxu0 0.0
    %97 = vmatpush1.msra.mxu0 0.0
    %98 = vmatprep.subr.mxu0 0.0
    %99 = vmatpush1.msra.mxu0 0.0
    %100 = vmatprep.subr.mxu0 0.0
    %101 = vmatpush1.msra.mxu0 0.0
    %102 = vmatprep.subr.mxu0 0.0
    %103 = vmatpush1.msra.mxu0 0.0
    %104 = vmatprep.subr.mxu0 0.0
    %105 = vmatpush1.msra.mxu0 0.0
    %106 = vmatprep.subr.mxu0 0.0
    %107 = vmatpush1.msra.mxu0 0.0
    %108 = vmatprep.subr.mxu0 0.0
    %109 = vmatpush1.msra.mxu0 0.0
    %110 = vmatprep.subr.mxu0 0.0
    %111 = vmatpush1.msra.mxu0 0.0
    %112 = vmatprep.subr.mxu0 0.0
    %113 = vmatpush1.msra.mxu0 0.0
    %114 = vmatprep.subr.mxu0 0.0
    %115 = vmatpush1.msra.mxu0 %v69
    %116 = vmatprep.subr.mxu0 0.0
    %117 = vmatpush1.msra.mxu0 %v68
    %118 = vmatprep.subr.mxu0 0.0
    %119 = vmatpush1.msra.mxu0 %v67
    %120 = vmatprep.subr.mxu0 0.0
    %121 = vmatpush1.msra.mxu0 %v66
    %122 = vmatprep.subr.mxu0 0.0
    %123 = vmatpush2.msra.mxu0 0.0
    %124 = vmatprep.subr.mxu0 0.0
    %125 = vmatpush2.msra.mxu0 0.0
    %126 = vmatprep.subr.mxu0 0.0
    %127 = vmatpush2.msra.mxu0 0.0
    %128 = vmatprep.subr.mxu0 0.0
    %129 = vmatpush2.msra.mxu0 0.0
    %130 = vmatprep.subr.mxu0 0.0
    %131 = vmatpush2.msra.mxu0 0.0
    %132 = vmatprep.subr.mxu0 0.0
    %133 = vmatpush2.msra.mxu0 0.0
    %134 = vmatprep.subr.mxu0 0.0
    %135 = vmatpush2.msra.mxu0 0.0
    %136 = vmatprep.subr.mxu0 0.0
    %137 = vmatpush2.msra.mxu0 0.0
    %138 = vmatprep.subr.mxu0 0.0
    %139 = vmatpush2.msra.mxu0 0.0
    %140 = vmatprep.subr.mxu0 0.0
    %141 = vmatpush2.msra.mxu0 0.0
    %142 = vmatprep.subr.mxu0 0.0
    %143 = vmatpush2.msra.mxu0 0.0
    %144 = vmatprep.subr.mxu0 0.0
    %145 = vmatpush2.msra.mxu0 0.0
    %146 = vmatprep.subr.mxu0 0.0
    %147 = vmatpush2.msra.mxu0 0.0
    %148 = vmatprep.subr.mxu0 0.0
    %149 = vmatpush2.msra.mxu0 0.0
    %150 = vmatprep.subr.mxu0 0.0
    %151 = vmatpush2.msra.mxu0 0.0
    %152 = vmatprep.subr.mxu0 0.0
    %153 = vmatpush2.msra.mxu0 0.0
    %154 = vmatprep.mubr.f32.mxu0 0.0
    %155 = vmatmul.mubr.f32.gmra.mxu0 %v79
    %v156 = vpop.f32.mrf.mxu0
    %v157 = vadd.f32 %v75, %v156
    %v158 = vpop.f32.mrf.mxu0
    %159 = vmatprep.mubr.f32.mxu0 0.0
    %160 = vmatmul.mubr.f32.gmra.mxu0 %v82
    %v161 = vpop.f32.mrf.mxu0
    %v162 = vadd.f32 %v75, %v161
    %v163 = vpop.f32.mrf.mxu0
    %164 = vmatprep.mubr.f32.mxu0 0.0
    %165 = vmatmul.mubr.f32.gmra.mxu0 %v85
    %v166 = vpop.f32.mrf.mxu0
    %v167 = vadd.f32 %v75, %v166
    %v168 = vpop.f32.mrf.mxu0
    %169 = vmatprep.mubr.f32.mxu0 0.0
    %170 = vmatmul.mubr.f32.gmra.mxu0 %v88
    %v171 = vpop.f32.mrf.mxu0
    %v172 = vadd.f32 %v75, %v171
    %v173 = vpop.f32.mrf.mxu0
    %174 = vdwg.mxu0
    %v175 = vmax.f32 %v157, 0.0
    %v176 = vmax.f32 %v162, 0.0
    %v177 = vmax.f32 %v167, 0.0
    %v178 = vmax.f32 %v172, 0.0
    %v179 = vld [vmem:[#allocation7] sm:$0xff]
    %v180 = vld [vmem:[#allocation7 + $0x8] sm:$0xff]
    %v181 = vld [vmem:[#allocation7 + $0x10] sm:$0xff]
    %v182 = vld [vmem:[#allocation7 + $0x18] sm:$0xff]
    %v183 = vld [vmem:[#allocation7 + $0x20] sm:$0xff]
    %v184 = vld [vmem:[#allocation7 + $0x28] sm:$0xff]
    %v185 = vld [vmem:[#allocation7 + $0x30] sm:$0xff]
    %v186 = vld [vmem:[#allocation7 + $0x38] sm:$0xff]
    %v187 = vld [vmem:[#allocation7 + $0x40] sm:$0xff]
    %v188 = vld [vmem:[#allocation7 + $0x48] sm:$0xff]
    %v189 = vld [vmem:[#allocation7 + $0x50] sm:$0xff]
    %v190 = vld [vmem:[#allocation7 + $0x58] sm:$0xff]
    %v191 = vld [vmem:[%s4] sm:$0x7]
    %v193 = vlaneseq
    %v194 = vshrl.u32 %v193, 7
    %v195 = vsub.s32 0, %v194
    %v196 = vrot.slane %v191, %v195
    %v197 = vlaneseq
    %v198 = vshrl.u32 %v197, 7
    %v199 = vsub.s32 1, %v198
    %v200 = vrot.slane %v191, %v199
    %v201 = vlaneseq
    %v202 = vshrl.u32 %v201, 7
    %v203 = vsub.s32 2, %v202
    %v204 = vrot.slane %v191, %v203
    %v209 = vsel %vm77, %v175, 0
    %v212 = vsel %vm77, %v176, 0
    %v215 = vsel %vm77, %v177, 0
    %v218 = vsel %vm77, %v178, 0
    %220 = vmatprep.subr.mxu0 0.0
    %221 = vmatpush1.msra.mxu0 0.0
    %222 = vmatprep.subr.mxu0 0.0
    %223 = vmatpush1.msra.mxu0 0.0
    %224 = vmatprep.subr.mxu0 0.0
    %225 = vmatpush1.msra.mxu0 0.0
    %226 = vmatprep.subr.mxu0 0.0
    %227 = vmatpush1.msra.mxu0 0.0
    %228 = vmatprep.subr.mxu0 0.0
    %229 = vmatpush1.msra.mxu0 0.0
    %230 = vmatprep.subr.mxu0 0.0
    %231 = vmatpush1.msra.mxu0 0.0
    %232 = vmatprep.subr.mxu0 0.0
    %233 = vmatpush1.msra.mxu0 0.0
    %234 = vmatprep.subr.mxu0 0.0
    %235 = vmatpush1.msra.mxu0 0.0
    %236 = vmatprep.subr.mxu0 0.0
    %237 = vmatpush1.msra.mxu0 0.0
    %238 = vmatprep.subr.mxu0 0.0
    %239 = vmatpush1.msra.mxu0 0.0
    %240 = vmatprep.subr.mxu0 0.0
    %241 = vmatpush1.msra.mxu0 0.0
    %242 = vmatprep.subr.mxu0 0.0
    %243 = vmatpush1.msra.mxu0 0.0
    %244 = vmatprep.subr.mxu0 %v189
    %245 = vmatpush1.msra.mxu0 %v188
    %246 = vmatprep.subr.mxu0 %v186
    %247 = vmatpush1.msra.mxu0 %v185
    %248 = vmatprep.subr.mxu0 %v183
    %249 = vmatpush1.msra.mxu0 %v182
    %250 = vmatprep.subr.mxu0 %v180
    %251 = vmatpush1.msra.mxu0 %v179
    %252 = vmatprep.subr.mxu0 0.0
    %253 = vmatpush2.msra.mxu0 0.0
    %254 = vmatprep.subr.mxu0 0.0
    %255 = vmatpush2.msra.mxu0 0.0
    %256 = vmatprep.subr.mxu0 0.0
    %257 = vmatpush2.msra.mxu0 0.0
    %258 = vmatprep.subr.mxu0 0.0
    %259 = vmatpush2.msra.mxu0 0.0
    %260 = vmatprep.subr.mxu0 0.0
    %261 = vmatpush2.msra.mxu0 0.0
    %262 = vmatprep.subr.mxu0 0.0
    %263 = vmatpush2.msra.mxu0 0.0
    %264 = vmatprep.subr.mxu0 0.0
    %265 = vmatpush2.msra.mxu0 0.0
    %266 = vmatprep.subr.mxu0 0.0
    %267 = vmatpush2.msra.mxu0 0.0
    %268 = vmatprep.subr.mxu0 0.0
    %269 = vmatpush2.msra.mxu0 0.0
    %270 = vmatprep.subr.mxu0 0.0
    %271 = vmatpush2.msra.mxu0 0.0
    %272 = vmatprep.subr.mxu0 0.0
    %273 = vmatpush2.msra.mxu0 0.0
    %274 = vmatprep.subr.mxu0 0.0
    %275 = vmatpush2.msra.mxu0 0.0
    %276 = vmatprep.subr.mxu0 0.0
    %277 = vmatpush2.msra.mxu0 0.0
    %278 = vmatprep.subr.mxu0 0.0
    %279 = vmatpush2.msra.mxu0 0.0
    %280 = vmatprep.subr.mxu0 0.0
    %281 = vmatpush2.msra.mxu0 0.0
    %282 = vmatprep.subr.mxu0 0.0
    %283 = vmatpush2.msra.mxu0 0.0
    %284 = vmatprep.mubr.f32.mxu0 0.0
    %285 = vmatmul.mubr.f32.gmra.mxu0 %v209
    %v286 = vpop.f32.mrf.mxu0
    %v287 = vadd.f32 %v196, %v286
    %v288 = vpop.f32.mrf.mxu0
    %v289 = vadd.f32 %v200, %v288
    %290 = vmatprep.mubr.f32.mxu0 0.0
    %291 = vmatmul.mubr.f32.gmra.mxu0 %v212
    %v292 = vpop.f32.mrf.mxu0
    %v293 = vadd.f32 %v196, %v292
    %v294 = vpop.f32.mrf.mxu0
    %v295 = vadd.f32 %v200, %v294
    %296 = vmatprep.mubr.f32.mxu0 0.0
    %297 = vmatmul.mubr.f32.gmra.mxu0 %v215
    %v298 = vpop.f32.mrf.mxu0
    %v299 = vadd.f32 %v196, %v298
    %v300 = vpop.f32.mrf.mxu0
    %v301 = vadd.f32 %v200, %v300
    %302 = vmatprep.mubr.f32.mxu0 0.0
    %303 = vmatmul.mubr.f32.gmra.mxu0 %v218
    %v304 = vpop.f32.mrf.mxu0
    %v305 = vadd.f32 %v196, %v304
    %v306 = vpop.f32.mrf.mxu0
    %v307 = vadd.f32 %v200, %v306
    %308 = vdwg.mxu0
    %309 = vmatprep.subr.mxu0 0.0
    %310 = vmatpush1.msra.mxu0 0.0
    %311 = vmatprep.subr.mxu0 0.0
    %312 = vmatpush1.msra.mxu0 0.0
    %313 = vmatprep.subr.mxu0 0.0
    %314 = vmatpush1.msra.mxu0 0.0
    %315 = vmatprep.subr.mxu0 0.0
    %316 = vmatpush1.msra.mxu0 0.0
    %317 = vmatprep.subr.mxu0 0.0
    %318 = vmatpush1.msra.mxu0 0.0
    %319 = vmatprep.subr.mxu0 0.0
    %320 = vmatpush1.msra.mxu0 0.0
    %321 = vmatprep.subr.mxu0 0.0
    %322 = vmatpush1.msra.mxu0 0.0
    %323 = vmatprep.subr.mxu0 0.0
    %324 = vmatpush1.msra.mxu0 0.0
    %325 = vmatprep.subr.mxu0 0.0
    %326 = vmatpush1.msra.mxu0 0.0
    %327 = vmatprep.subr.mxu0 0.0
    %328 = vmatpush1.msra.mxu0 0.0
    %329 = vmatprep.subr.mxu0 0.0
    %330 = vmatpush1.msra.mxu0 0.0
    %331 = vmatprep.subr.mxu0 0.0
    %332 = vmatpush1.msra.mxu0 0.0
    %333 = vmatprep.subr.mxu0 0.0
    %334 = vmatpush1.msra.mxu0 %v190
    %335 = vmatprep.subr.mxu0 0.0
    %336 = vmatpush1.msra.mxu0 %v187
    %337 = vmatprep.subr.mxu0 0.0
    %338 = vmatpush1.msra.mxu0 %v184
    %339 = vmatprep.subr.mxu0 0.0
    %340 = vmatpush1.msra.mxu0 %v181
    %341 = vmatprep.subr.mxu0 0.0
    %342 = vmatpush2.msra.mxu0 0.0
    %343 = vmatprep.subr.mxu0 0.0
    %344 = vmatpush2.msra.mxu0 0.0
    %345 = vmatprep.subr.mxu0 0.0
    %346 = vmatpush2.msra.mxu0 0.0
    %347 = vmatprep.subr.mxu0 0.0
    %348 = vmatpush2.msra.mxu0 0.0
    %349 = vmatprep.subr.mxu0 0.0
    %350 = vmatpush2.msra.mxu0 0.0
    %351 = vmatprep.subr.mxu0 0.0
    %352 = vmatpush2.msra.mxu0 0.0
    %353 = vmatprep.subr.mxu0 0.0
    %354 = vmatpush2.msra.mxu0 0.0
    %355 = vmatprep.subr.mxu0 0.0
    %356 = vmatpush2.msra.mxu0 0.0
    %357 = vmatprep.subr.mxu0 0.0
    %358 = vmatpush2.msra.mxu0 0.0
    %359 = vmatprep.subr.mxu0 0.0
    %360 = vmatpush2.msra.mxu0 0.0
    %361 = vmatprep.subr.mxu0 0.0
    %362 = vmatpush2.msra.mxu0 0.0
    %363 = vmatprep.subr.mxu0 0.0
    %364 = vmatpush2.msra.mxu0 0.0
    %365 = vmatprep.subr.mxu0 0.0
    %366 = vmatpush2.msra.mxu0 0.0
    %367 = vmatprep.subr.mxu0 0.0
    %368 = vmatpush2.msra.mxu0 0.0
    %369 = vmatprep.subr.mxu0 0.0
    %370 = vmatpush2.msra.mxu0 0.0
    %371 = vmatprep.subr.mxu0 0.0
    %372 = vmatpush2.msra.mxu0 0.0
    %373 = vmatprep.mubr.f32.mxu0 0.0
    %374 = vmatmul.mubr.f32.gmra.mxu0 %v209
    %v375 = vpop.f32.mrf.mxu0
    %v376 = vadd.f32 %v204, %v375
    %v377 = vpop.f32.mrf.mxu0
    %378 = vmatprep.mubr.f32.mxu0 0.0
    %379 = vmatmul.mubr.f32.gmra.mxu0 %v212
    %v380 = vpop.f32.mrf.mxu0
    %v381 = vadd.f32 %v204, %v380
    %v382 = vpop.f32.mrf.mxu0
    %383 = vmatprep.mubr.f32.mxu0 0.0
    %384 = vmatmul.mubr.f32.gmra.mxu0 %v215
    %v385 = vpop.f32.mrf.mxu0
    %v386 = vadd.f32 %v204, %v385
    %v387 = vpop.f32.mrf.mxu0
    %388 = vmatprep.mubr.f32.mxu0 0.0
    %389 = vmatmul.mubr.f32.gmra.mxu0 %v218
    %v390 = vpop.f32.mrf.mxu0
    %v391 = vadd.f32 %v204, %v390
    %v392 = vpop.f32.mrf.mxu0
    %393 = vdwg.mxu0
    %394 = vmax.xlane.f32.xlu0 %v287
    %v395 = vpop.xlane.xlu0 %394
    %396 = vmax.xlane.f32.xlu0 %v293
    %v397 = vpop.xlane.xlu0 %396
    %398 = vmax.xlane.f32.xlu0 %v299
    %v399 = vpop.xlane.xlu0 %398
    %400 = vmax.xlane.f32.xlu0 %v305
    %v401 = vpop.xlane.xlu0 %400
    %v402 = vsub.f32 %v287, %v395
    %v403 = vsub.f32 %v293, %v397
    %v404 = vsub.f32 %v299, %v399
    %v405 = vsub.f32 %v305, %v401
    %v406 = vmul.f32 %v402, 1.442695
    %v407 = vpow.pop %v406
    %v408 = vmul.f32 %v403, 1.442695
    %v409 = vpow.pop %v408
    %v410 = vmul.f32 %v404, 1.442695
    %v411 = vpow.pop %v410
    %v412 = vmul.f32 %v405, 1.442695
    %v413 = vpow.pop %v412
    %414 = vadd.xlane.f32.xlu0 %v407
    %v415 = vpop.xlane.xlu0 %414
    %416 = vadd.xlane.f32.xlu0 %v409
    %v417 = vpop.xlane.xlu0 %416
    %418 = vadd.xlane.f32.xlu0 %v411
    %v419 = vpop.xlane.xlu0 %418
    %420 = vadd.xlane.f32.xlu0 %v413
    %v421 = vpop.xlane.xlu0 %420
    %v422 = vrcp.pop %v415
    %v423 = vmul.f32 %v407, %v422
    %v424 = vrcp.pop %v417
    %v425 = vmul.f32 %v409, %v424
    %v426 = vrcp.pop %v419
    %v427 = vmul.f32 %v411, %v426
    %v428 = vrcp.pop %v421
    %v429 = vmul.f32 %v413, %v428
    %430 = vst [vmem:[#allocation8] sm:$0xff] %v423
    %431 = vst [vmem:[#allocation8 + $0x18] sm:$0xff] %v425
    %432 = vst [vmem:[#allocation8 + $0x30] sm:$0xff] %v427
    %433 = vst [vmem:[#allocation8 + $0x48] sm:$0xff] %v429
    %434 = vst [vmem:[#allocation8 + $0x8] sm:$0xff] %v289
    %435 = vst [vmem:[#allocation8 + $0x20] sm:$0xff] %v295
    %436 = vst [vmem:[#allocation8 + $0x38] sm:$0xff] %v301
    %437 = vst [vmem:[#allocation8 + $0x50] sm:$0xff] %v307
    %v438 = vmul.f32 %v376, 1.442695
    %v439 = vpow.pop %v438
    %v440 = vmul.f32 %v381, 1.442695
    %v441 = vpow.pop %v440
    %v442 = vmul.f32 %v386, 1.442695
    %v443 = vpow.pop %v442
    %v444 = vmul.f32 %v391, 1.442695
    %v445 = vpow.pop %v444
    %446 = vst [vmem:[#allocation8 + $0x10] sm:$0xff] %v439
    %447 = vst [vmem:[#allocation8 + $0x28] sm:$0xff] %v441
    %448 = vst [vmem:[#allocation8 + $0x40] sm:$0xff] %v443
    %449 = vst [vmem:[#allocation8 + $0x58] sm:$0xff] %v445
    // Predicated region
    $region34: #{tpu_custom_call.1} parent=1 // pred_check
      _
    $region35: #{tpu_custom_call.1} parent=1 // pred_check_branch
      %451 = sbr.rel (0) target = $region37
    $region36: #{tpu_custom_call.1} parent=1 // pred_region
      %s453 = ssub.s32 1536, 1536
      %454 = vsyncadd [#allocation4], %s453
      %s455 = sshll.u32 [#allocation8], 4
      %s456 = int_to_ptr.vmem [resolvable:$true] %s455
      %461 = dma.vmem_to_hbm [thread:$0]  %s456, 1536, %s5, [#allocation4], 384, 384, 24
    $region37: #{tpu_custom_call.1} parent=1 // pred_fallthru
      _
    // Predicated region
    $region38: #{tpu_custom_call.1} parent=1 // pred_check
      _
    $region39: #{tpu_custom_call.1} parent=1 // pred_check_branch
      %463 = sbr.rel (0) target = $region41
    $region40: #{tpu_custom_call.1} parent=1 // pred_region
      %464 = dma.done [#allocation4], 1536
    $region41: #{tpu_custom_call.1} parent=1 // pred_fallthru
      _
    %465 = vsyncpa [#allocation3], 1
    %466 = vsyncpa [#allocation6], 1
    %467 = vsyncpa [#allocation4], 1

</llo_original>
